<compile_context>
chip_gen: v6e
topology: v6e:2x2x1
jax: 0.10.0
libtpu: 0.0.40
codegen_flags: <defaults>
</compile_context>

<pallas_src>
import functools

import jax
import jax.numpy as jnp
from jax.experimental import pallas as pl
from jax.experimental.pallas import tpu as pltpu


def _round_up8(x):
    return (x + 7) // 8 * 8


def _pack_offsets(k3):
    """Row offsets of each parameter block inside the packed buffer.

    Every block starts at a sublane-aligned (multiple-of-8) row.
    """
    o_w1pc = 0                              # [k3, 64]   W1 rows for pc input
    o_w1ac = _round_up8(o_w1pc + k3)        # [3, 64]    W1 rows for action input
    o_b1 = _round_up8(o_w1ac + 3)           # [1, 64]
    o_w2 = _round_up8(o_b1 + 1)             # [64, 64]
    o_b2 = o_w2 + 64                        # [1, 64]
    o_w3 = _round_up8(o_b2 + 1)             # [64, k3]
    o_b3 = o_w3 + 64                        # [1, k3]
    rows = _round_up8(o_b3 + 1)
    return o_w1pc, o_w1ac, o_b1, o_w2, o_b2, o_w3, o_b3, rows


def _mlp_kernel(pc_ref, act_ref, p_ref, o_ref, *, k3):
    """fc1+ReLU, fc2+ReLU, fc3, residual add -- all in one VMEM-resident pass."""
    o_w1pc, o_w1ac, o_b1, o_w2, o_b2, o_w3, o_b3, _ = _pack_offsets(k3)

    pc = pc_ref[...]                                   # [B, k3]
    act = act_ref[...]                                 # [B, 3]

    # fc1: [pc | act] @ W1 + b1, computed as a split matmul (no concat needed)
    w1_pc = p_ref[o_w1pc:o_w1pc + k3, :64]
    w1_ac = p_ref[o_w1ac:o_w1ac + 3, :64]
    b1 = p_ref[o_b1:o_b1 + 1, :64]
    h1 = (jnp.dot(pc, w1_pc, preferred_element_type=jnp.float32)
          + jnp.dot(act, w1_ac, preferred_element_type=jnp.float32))
    h1 = jnp.maximum(h1 + b1, 0.0)

    # fc2 + ReLU
    w2 = p_ref[o_w2:o_w2 + 64, :64]
    b2 = p_ref[o_b2:o_b2 + 1, :64]
    h2 = jnp.maximum(jnp.dot(h1, w2, preferred_element_type=jnp.float32) + b2, 0.0)

    # fc3 + residual (pc_ref is reused for the residual add)
    w3 = p_ref[o_w3:o_w3 + 64, :k3]
    b3 = p_ref[o_b3:o_b3 + 1, :k3]
    y = jnp.dot(h2, w3, preferred_element_type=jnp.float32) + b3       # [B, k3]
    o_ref[...] = pc + y


def dynamics_predictor_forward(input_pc, input_action, packed_params):
    """Forward semantics of get_model.forward.

    input_pc:       [B, K, 3] float32
    input_action:   [B, 3]    float32 (any shape that flattens to [-1, 3])
    packed_params:  [R, max(64, 3K)] float32 from pack_params()
    returns:        [B, K, 3] float32
    """
    B, K, _ = input_pc.shape
    k3 = K * 3

    pc_flat = input_pc.reshape(-1, k3)          # view([-1, K*3])
    act_flat = input_action.reshape(-1, 3)      # view([-1, 3])

    out_flat = pl.pallas_call(
        functools.partial(_mlp_kernel, k3=k3),
        out_shape=jax.ShapeDtypeStruct((B, k3), jnp.float32),
        in_specs=[
            pl.BlockSpec(memory_space=pltpu.MemorySpace.VMEM),  # pc_flat [B, k3]
            pl.BlockSpec(memory_space=pltpu.MemorySpace.VMEM),  # act     [B, 3]
            pl.BlockSpec(memory_space=pltpu.MemorySpace.VMEM),  # params  [R, Wp]
        ],
        out_specs=pl.BlockSpec(memory_space=pltpu.MemorySpace.VMEM),
    )(pc_flat, act_flat, packed_params)

    return out_flat.reshape(-1, K, 3)           # view([-1, K, 3])


def init_params(key, num_cp):
    """Deterministic synthetic parameters matching nn.Linear shapes.

    Stored as [in_features, out_features] (transpose of torch weight) so the
    math is x @ W + b.
    """
    d_in = num_cp * 3 + 3
    d_out = num_cp * 3
    k1, k2, k3, k4, k5, k6 = jax.random.split(key, 6)
    return {
        "w1": jax.random.normal(k1, (d_in, 64), jnp.float32) * 0.1,
        "b1": jax.random.normal(k2, (64,), jnp.float32) * 0.1,
        "w2": jax.random.normal(k3, (64, 64), jnp.float32) * 0.1,
        "b2": jax.random.normal(k4, (64,), jnp.float32) * 0.1,
        "w3": jax.random.normal(k5, (64, d_out), jnp.float32) * 0.1,
        "b3": jax.random.normal(k6, (d_out,), jnp.float32) * 0.1,
    }


def pack_params(params, num_cp):
    """One-time packing of all weights + biases into a single f32 buffer."""
    k3 = num_cp * 3
    o_w1pc, o_w1ac, o_b1, o_w2, o_b2, o_w3, o_b3, rows = _pack_offsets(k3)
    wp = max(64, k3)
    p = jnp.zeros((rows, wp), jnp.float32)
    w1 = params["w1"]                              # [k3 + 3, 64]
    p = p.at[o_w1pc:o_w1pc + k3, :64].set(w1[:k3])
    p = p.at[o_w1ac:o_w1ac + 3, :64].set(w1[k3:])
    p = p.at[o_b1, :64].set(params["b1"])
    p = p.at[o_w2:o_w2 + 64, :64].set(params["w2"])
    p = p.at[o_b2, :64].set(params["b2"])
    p = p.at[o_w3:o_w3 + 64, :k3].set(params["w3"])
    p = p.at[o_b3, :k3].set(params["b3"])
    return p


def _reference_forward(input_pc, input_action, params):
    """Pure-JAX reference mirroring the PyTorch forward, for sanity check."""
    B, K, _ = input_pc.shape
    x = jnp.concatenate(
        [input_pc.reshape(-1, K * 3), input_action.reshape(-1, 3)], axis=1)
    h1 = jax.nn.relu(x @ params["w1"] + params["b1"])
    h2 = jax.nn.relu(h1 @ params["w2"] + params["b2"])
    y = h2 @ params["w3"] + params["b3"]
    return input_pc + y.reshape(-1, K, 3)


if __name__ == "__main__":
    num_cp = 8          # number of keypoints
    batch = 8

    key = jax.random.PRNGKey(0)
    kp, ka, kw = jax.random.split(key, 3)

    input_pc = jax.random.normal(kp, (batch, num_cp, 3), jnp.float32)
    input_action = jax.random.normal(ka, (batch, 3), jnp.float32)
    params = init_params(kw, num_cp)
    packed = pack_params(params, num_cp)

    out = dynamics_predictor_forward(input_pc, input_action, packed)
    out = jax.block_until_ready(out)

    ref = _reference_forward(input_pc, input_action, params)
    assert out.shape == (batch, num_cp, 3)
    assert jnp.allclose(out, ref, atol=1e-4, rtol=1e-4)

    print("KERNEL_OK")
</pallas_src>

<mosaic_0001>
module attributes {stable_mosaic.version = 11 : i64} {
  func.func @_mlp_kernel(%arg0: memref<8x24xf32, #tpu.memory_space<vmem>>, %arg1: memref<8x3xf32, #tpu.memory_space<vmem>>, %arg2: memref<184x64xf32, #tpu.memory_space<vmem>>, %arg3: memref<8x24xf32, #tpu.memory_space<vmem>>) attributes {dimension_semantics = [], scalar_prefetch = 0 : i64, scratch_operands = 0 : i64, tpu.core_type = #tpu.core_type<tc>} {
    %c0 = arith.constant 0 : index
    %c0_0 = arith.constant 0 : index
    %0 = vector.load %arg0[%c0, %c0_0] : memref<8x24xf32, #tpu.memory_space<vmem>>, vector<8x24xf32>
    %c0_1 = arith.constant 0 : index
    %c0_2 = arith.constant 0 : index
    %1 = vector.load %arg1[%c0_1, %c0_2] : memref<8x3xf32, #tpu.memory_space<vmem>>, vector<8x3xf32>
    %c0_3 = arith.constant 0 : index
    %c0_4 = arith.constant 0 : index
    %2 = vector.load %arg2[%c0_3, %c0_4] : memref<184x64xf32, #tpu.memory_space<vmem>>, vector<24x64xf32>
    %c24 = arith.constant 24 : index
    %c0_5 = arith.constant 0 : index
    %3 = vector.load %arg2[%c24, %c0_5] : memref<184x64xf32, #tpu.memory_space<vmem>>, vector<3x64xf32>
    %c32 = arith.constant 32 : index
    %c0_6 = arith.constant 0 : index
    %4 = vector.load %arg2[%c32, %c0_6] : memref<184x64xf32, #tpu.memory_space<vmem>>, vector<1x64xf32>
    %cst = arith.constant dense<0.000000e+00> : vector<8x64xf32>
    %5 = tpu.matmul %0, %2, %cst {dimension_numbers = #tpu.dot_dimension_numbers<[1], [0], [0], [1], [0, 0, 1, 1], [], []>} : vector<8x24xf32>, vector<24x64xf32>, vector<8x64xf32> -> vector<8x64xf32>
    %cst_7 = arith.constant dense<0.000000e+00> : vector<8x64xf32>
    %6 = tpu.matmul %1, %3, %cst_7 {dimension_numbers = #tpu.dot_dimension_numbers<[1], [0], [0], [1], [0, 0, 1, 1], [], []>} : vector<8x3xf32>, vector<3x64xf32>, vector<8x64xf32> -> vector<8x64xf32>
    %7 = arith.addf %5, %6 : vector<8x64xf32>
    %8 = vector.broadcast %4 : vector<1x64xf32> to vector<8x64xf32>
    %9 = arith.addf %7, %8 : vector<8x64xf32>
    %cst_8 = arith.constant 0.000000e+00 : f32
    %10 = vector.broadcast %cst_8 : f32 to vector<8x64xf32>
    %11 = arith.maximumf %9, %10 : vector<8x64xf32>
    %c40 = arith.constant 40 : index
    %c0_9 = arith.constant 0 : index
    %12 = vector.load %arg2[%c40, %c0_9] : memref<184x64xf32, #tpu.memory_space<vmem>>, vector<64x64xf32>
    %c104 = arith.constant 104 : index
    %c0_10 = arith.constant 0 : index
    %13 = vector.load %arg2[%c104, %c0_10] : memref<184x64xf32, #tpu.memory_space<vmem>>, vector<1x64xf32>
    %cst_11 = arith.constant dense<0.000000e+00> : vector<8x64xf32>
    %14 = tpu.matmul %11, %12, %cst_11 {dimension_numbers = #tpu.dot_dimension_numbers<[1], [0], [0], [1], [0, 0, 1, 1], [], []>} : vector<8x64xf32>, vector<64x64xf32>, vector<8x64xf32> -> vector<8x64xf32>
    %15 = vector.broadcast %13 : vector<1x64xf32> to vector<8x64xf32>
    %16 = arith.addf %14, %15 : vector<8x64xf32>
    %cst_12 = arith.constant 0.000000e+00 : f32
    %17 = vector.broadcast %cst_12 : f32 to vector<8x64xf32>
    %18 = arith.maximumf %16, %17 : vector<8x64xf32>
    %c112 = arith.constant 112 : index
    %c0_13 = arith.constant 0 : index
    %19 = vector.load %arg2[%c112, %c0_13] : memref<184x64xf32, #tpu.memory_space<vmem>>, vector<64x24xf32>
    %c176 = arith.constant 176 : index
    %c0_14 = arith.constant 0 : index
    %20 = vector.load %arg2[%c176, %c0_14] : memref<184x64xf32, #tpu.memory_space<vmem>>, vector<1x24xf32>
    %cst_15 = arith.constant dense<0.000000e+00> : vector<8x24xf32>
    %21 = tpu.matmul %18, %19, %cst_15 {dimension_numbers = #tpu.dot_dimension_numbers<[1], [0], [0], [1], [0, 0, 1, 1], [], []>} : vector<8x64xf32>, vector<64x24xf32>, vector<8x24xf32> -> vector<8x24xf32>
    %22 = vector.broadcast %20 : vector<1x24xf32> to vector<8x24xf32>
    %23 = arith.addf %21, %22 : vector<8x24xf32>
    %24 = arith.addf %0, %23 : vector<8x24xf32>
    %c0_16 = arith.constant 0 : index
    %c0_17 = arith.constant 0 : index
    %25 = vector.load %arg3[%c0_16, %c0_17] : memref<8x24xf32, #tpu.memory_space<vmem>>, vector<8x24xf32>
    tpu.vector_store %arg3[%c0_16, %c0_17], %24 {strides = array<i32>} : memref<8x24xf32, #tpu.memory_space<vmem>>, vector<8x24xf32>,
    return
  }
}

</mosaic_0001>

<llo_original>
// kernel: tpu_custom_call.1
$region0: #{tpu_custom_call.1}
  #allocation0 [shape = 'u32[]', space=smem, size = 0x4, offset = 0x4, fixed_abs, tag = 'smem constant byte address 0x4 - core index']
  #allocation1 [shape = 'u32[144,128]{1,0:T(1,128)}', space=vmem, size = 0x12000, scoped, tag = 'internal scratch']
  %s0 = inlined_call_operand.vmem [shape: f32[8,24], index: 0, kind: input, shape index: {}]
  %s1 = inlined_call_operand.vmem [shape: f32[8,3], index: 1, kind: input, shape index: {}]
  %s2 = inlined_call_operand.vmem [shape: f32[184,64], index: 2, kind: input, shape index: {}]
  %s3 = inlined_call_operand.hbm [shape: f32[8,24], index: 3, kind: output, shape index: {}]
  %s4 = sld [smem:[#allocation0]]
  $region22: #{tpu_custom_call.1} parent=0
    _
  %s6 = ssub.s32 1, %s4
  %s7 = scalar_select 0, %s6, %s4
  $region1: #{tpu_custom_call.1} parent=0
    #allocation2 [shape = 'u8[4096]{0}', space=vmem, size = 0x1000, scoped, tag = 'output window, operand 0, single buffered']
    #allocation3 [shape = 's32[1]{0}', space=sflag, size = 0x4, scoped, tag = 'scoped memory for tpu_custom_call.1']
    %8 = vsyncpa [#allocation3], 0
    // Predicated region
    $region2: #{tpu_custom_call.1} parent=1 // pred_check
      _
    $region3: #{tpu_custom_call.1} parent=1 // pred_check_branch
      %10 = sbr.rel (0) target = $region5
    $region4: #{tpu_custom_call.1} parent=1 // pred_region
      _
    $region5: #{tpu_custom_call.1} parent=1 // pred_fallthru
      _
    // Predicated region
    $region6: #{tpu_custom_call.1} parent=1 // pred_check
      _
    $region7: #{tpu_custom_call.1} parent=1 // pred_check_branch
      %12 = sbr.rel (0) target = $region9
    $region8: #{tpu_custom_call.1} parent=1 // pred_region
      _
    $region9: #{tpu_custom_call.1} parent=1 // pred_fallthru
      _
    // Predicated region
    $region10: #{tpu_custom_call.1} parent=1 // pred_check
      _
    $region11: #{tpu_custom_call.1} parent=1 // pred_check_branch
      %14 = sbr.rel (0) target = $region13
    $region12: #{tpu_custom_call.1} parent=1 // pred_region
      _
    $region13: #{tpu_custom_call.1} parent=1 // pred_fallthru
      _
    %v15 = vld [vmem:[%s0] sm:$0xff]
    %v16 = vld [vmem:[%s1] sm:$0xff]
    %v17 = vld [vmem:[%s2] sm:$0xff]
    %v18 = vld [vmem:[%s2 + $0x8] sm:$0xff]
    %v19 = vld [vmem:[%s2 + $0x10] sm:$0xff]
    %v20 = vld [vmem:[%s2 + $0x18] sm:$0x7]
    %v21 = vld [vmem:[%s2 + $0x20] sm:$0x1]
    %vm22 = vcmask 23552
    %v24 = vsel %vm22, %v16, 0
    %vm26 = vcmask 1042432
    %v28 = vsel %vm26, %v20, 0
    %30 = vmatprep.subr.mxu0 0.0
    %31 = vmatpush1.msra.mxu0 0.0
    %32 = vmatprep.subr.mxu0 0.0
    %33 = vmatpush1.msra.mxu0 0.0
    %34 = vmatprep.subr.mxu0 0.0
    %35 = vmatpush1.msra.mxu0 0.0
    %36 = vmatprep.subr.mxu0 0.0
    %37 = vmatpush1.msra.mxu0 0.0
    %38 = vmatprep.subr.mxu0 0.0
    %39 = vmatpush1.msra.mxu0 0.0
    %40 = vmatprep.subr.mxu0 0.0
    %41 = vmatpush1.msra.mxu0 0.0
    %42 = vmatprep.subr.mxu0 0.0
    %43 = vmatpush1.msra.mxu0 0.0
    %44 = vmatprep.subr.mxu0 0.0
    %45 = vmatpush1.msra.mxu0 0.0
    %46 = vmatprep.subr.mxu0 0.0
    %47 = vmatpush1.msra.mxu0 0.0
    %48 = vmatprep.subr.mxu0 0.0
    %49 = vmatpush1.msra.mxu0 0.0
    %50 = vmatprep.subr.mxu0 0.0
    %51 = vmatpush1.msra.mxu0 0.0
    %52 = vmatprep.subr.mxu0 0.0
    %53 = vmatpush1.msra.mxu0 0.0
    %54 = vmatprep.subr.mxu0 0.0
    %55 = vmatpush1.msra.mxu0 0.0
    %56 = vmatprep.subr.mxu0 0.0
    %57 = vmatpush1.msra.mxu0 0.0
    %58 = vmatprep.subr.mxu0 0.0
    %59 = vmatpush1.msra.mxu0 0.0
    %60 = vmatprep.subr.mxu0 0.0
    %61 = vmatpush1.msra.mxu0 %v28
    %62 = vmatprep.subr.mxu0 0.0
    %63 = vmatpush2.msra.mxu0 0.0
    %64 = vmatprep.subr.mxu0 0.0
    %65 = vmatpush2.msra.mxu0 0.0
    %66 = vmatprep.subr.mxu0 0.0
    %67 = vmatpush2.msra.mxu0 0.0
    %68 = vmatprep.subr.mxu0 0.0
    %69 = vmatpush2.msra.mxu0 0.0
    %70 = vmatprep.subr.mxu0 0.0
    %71 = vmatpush2.msra.mxu0 0.0
    %72 = vmatprep.subr.mxu0 0.0
    %73 = vmatpush2.msra.mxu0 0.0
    %74 = vmatprep.subr.mxu0 0.0
    %75 = vmatpush2.msra.mxu0 0.0
    %76 = vmatprep.subr.mxu0 0.0
    %77 = vmatpush2.msra.mxu0 0.0
    %78 = vmatprep.subr.mxu0 0.0
    %79 = vmatpush2.msra.mxu0 0.0
    %80 = vmatprep.subr.mxu0 0.0
    %81 = vmatpush2.msra.mxu0 0.0
    %82 = vmatprep.subr.mxu0 0.0
    %83 = vmatpush2.msra.mxu0 0.0
    %84 = vmatprep.subr.mxu0 0.0
    %85 = vmatpush2.msra.mxu0 0.0
    %86 = vmatprep.subr.mxu0 0.0
    %87 = vmatpush2.msra.mxu0 0.0
    %88 = vmatprep.subr.mxu0 0.0
    %89 = vmatpush2.msra.mxu0 0.0
    %90 = vmatprep.subr.mxu0 0.0
    %91 = vmatpush2.msra.mxu0 0.0
    %92 = vmatprep.subr.mxu0 0.0
    %93 = vmatpush2.msra.mxu0 0.0
    %94 = vmatprep.mubr.f32.mxu0 0.0
    %95 = vmatmul.mubr.f32.gmra.mxu0 %v24
    %v96 = vpop.f32.mrf.mxu0
    %v97 = vadd.f32 0.0, %v96
    %v98 = vpop.f32.mrf.mxu0
    %99 = vdwg.mxu0
    %vm100 = vcmask 195584
    %v102 = vsel %vm100, %v15, 0
    %104 = vmatprep.subr.mxu0 0.0
    %105 = vmatpush1.msra.mxu0 0.0
    %106 = vmatprep.subr.mxu0 0.0
    %107 = vmatpush1.msra.mxu0 0.0
    %108 = vmatprep.subr.mxu0 0.0
    %109 = vmatpush1.msra.mxu0 0.0
    %110 = vmatprep.subr.mxu0 0.0
    %111 = vmatpush1.msra.mxu0 0.0
    %112 = vmatprep.subr.mxu0 0.0
    %113 = vmatpush1.msra.mxu0 0.0
    %114 = vmatprep.subr.mxu0 0.0
    %115 = vmatpush1.msra.mxu0 0.0
    %116 = vmatprep.subr.mxu0 0.0
    %117 = vmatpush1.msra.mxu0 0.0
    %118 = vmatprep.subr.mxu0 0.0
    %119 = vmatpush1.msra.mxu0 0.0
    %120 = vmatprep.subr.mxu0 0.0
    %121 = vmatpush1.msra.mxu0 0.0
    %122 = vmatprep.subr.mxu0 0.0
    %123 = vmatpush1.msra.mxu0 0.0
    %124 = vmatprep.subr.mxu0 0.0
    %125 = vmatpush1.msra.mxu0 0.0
    %126 = vmatprep.subr.mxu0 0.0
    %127 = vmatpush1.msra.mxu0 0.0
    %128 = vmatprep.subr.mxu0 0.0
    %129 = vmatpush1.msra.mxu0 0.0
    %130 = vmatprep.subr.mxu0 0.0
    %131 = vmatpush1.msra.mxu0 %v19
    %132 = vmatprep.subr.mxu0 0.0
    %133 = vmatpush1.msra.mxu0 %v18
    %134 = vmatprep.subr.mxu0 0.0
    %135 = vmatpush1.msra.mxu0 %v17
    %136 = vmatprep.subr.mxu0 0.0
    %137 = vmatpush2.msra.mxu0 0.0
    %138 = vmatprep.subr.mxu0 0.0
    %139 = vmatpush2.msra.mxu0 0.0
    %140 = vmatprep.subr.mxu0 0.0
    %141 = vmatpush2.msra.mxu0 0.0
    %142 = vmatprep.subr.mxu0 0.0
    %143 = vmatpush2.msra.mxu0 0.0
    %144 = vmatprep.subr.mxu0 0.0
    %145 = vmatpush2.msra.mxu0 0.0
    %146 = vmatprep.subr.mxu0 0.0
    %147 = vmatpush2.msra.mxu0 0.0
    %148 = vmatprep.subr.mxu0 0.0
    %149 = vmatpush2.msra.mxu0 0.0
    %150 = vmatprep.subr.mxu0 0.0
    %151 = vmatpush2.msra.mxu0 0.0
    %152 = vmatprep.subr.mxu0 0.0
    %153 = vmatpush2.msra.mxu0 0.0
    %154 = vmatprep.subr.mxu0 0.0
    %155 = vmatpush2.msra.mxu0 0.0
    %156 = vmatprep.subr.mxu0 0.0
    %157 = vmatpush2.msra.mxu0 0.0
    %158 = vmatprep.subr.mxu0 0.0
    %159 = vmatpush2.msra.mxu0 0.0
    %160 = vmatprep.subr.mxu0 0.0
    %161 = vmatpush2.msra.mxu0 0.0
    %162 = vmatprep.subr.mxu0 0.0
    %163 = vmatpush2.msra.mxu0 0.0
    %164 = vmatprep.subr.mxu0 0.0
    %165 = vmatpush2.msra.mxu0 0.0
    %166 = vmatprep.subr.mxu0 0.0
    %167 = vmatpush2.msra.mxu0 0.0
    %168 = vmatprep.mubr.f32.mxu0 0.0
    %169 = vmatmul.mubr.f32.gmra.mxu0 %v102
    %v170 = vpop.f32.mrf.mxu0
    %v171 = vadd.f32 %v97, %v170
    %v172 = vpop.f32.mrf.mxu0
    %173 = vdwg.mxu0
    %v174 = vlaneseq
    %v175 = vshrl.u32 %v174, 7
    %v176 = vsub.s32 0, %v175
    %v177 = vrot.slane %v21, %v176
    %v178 = vadd.f32 %v171, %v177
    %v179 = vmax.f32 %v178, 0.0
    %v180 = vld [vmem:[%s2 + $0x28] sm:$0xff]
    %v181 = vld [vmem:[%s2 + $0x30] sm:$0xff]
    %v182 = vld [vmem:[%s2 + $0x38] sm:$0xff]
    %v183 = vld [vmem:[%s2 + $0x40] sm:$0xff]
    %v184 = vld [vmem:[%s2 + $0x48] sm:$0xff]
    %v185 = vld [vmem:[%s2 + $0x50] sm:$0xff]
    %v186 = vld [vmem:[%s2 + $0x58] sm:$0xff]
    %v187 = vld [vmem:[%s2 + $0x60] sm:$0xff]
    %v188 = vld [vmem:[%s2 + $0x68] sm:$0x1]
    %v189 = vlaneseq
    %v190 = vshrl.u32 %v189, 7
    %v191 = vsub.s32 0, %v190
    %v192 = vrot.slane %v188, %v191
    %vm193 = vcmask 523264
    %v195 = vsel %vm193, %v179, 0
    %197 = vmatprep.subr.mxu0 0.0
    %198 = vmatpush1.msra.mxu0 0.0
    %199 = vmatprep.subr.mxu0 0.0
    %200 = vmatpush1.msra.mxu0 0.0
    %201 = vmatprep.subr.mxu0 0.0
    %202 = vmatpush1.msra.mxu0 0.0
    %203 = vmatprep.subr.mxu0 0.0
    %204 = vmatpush1.msra.mxu0 0.0
    %205 = vmatprep.subr.mxu0 0.0
    %206 = vmatpush1.msra.mxu0 0.0
    %207 = vmatprep.subr.mxu0 0.0
    %208 = vmatpush1.msra.mxu0 0.0
    %209 = vmatprep.subr.mxu0 0.0
    %210 = vmatpush1.msra.mxu0 0.0
    %211 = vmatprep.subr.mxu0 0.0
    %212 = vmatpush1.msra.mxu0 0.0
    %213 = vmatprep.subr.mxu0 0.0
    %214 = vmatpush1.msra.mxu0 %v187
    %215 = vmatprep.subr.mxu0 0.0
    %216 = vmatpush1.msra.mxu0 %v186
    %217 = vmatprep.subr.mxu0 0.0
    %218 = vmatpush1.msra.mxu0 %v185
    %219 = vmatprep.subr.mxu0 0.0
    %220 = vmatpush1.msra.mxu0 %v184
    %221 = vmatprep.subr.mxu0 0.0
    %222 = vmatpush1.msra.mxu0 %v183
    %223 = vmatprep.subr.mxu0 0.0
    %224 = vmatpush1.msra.mxu0 %v182
    %225 = vmatprep.subr.mxu0 0.0
    %226 = vmatpush1.msra.mxu0 %v181
    %227 = vmatprep.subr.mxu0 0.0
    %228 = vmatpush1.msra.mxu0 %v180
    %229 = vmatprep.subr.mxu0 0.0
    %230 = vmatpush2.msra.mxu0 0.0
    %231 = vmatprep.subr.mxu0 0.0
    %232 = vmatpush2.msra.mxu0 0.0
    %233 = vmatprep.subr.mxu0 0.0
    %234 = vmatpush2.msra.mxu0 0.0
    %235 = vmatprep.subr.mxu0 0.0
    %236 = vmatpush2.msra.mxu0 0.0
    %237 = vmatprep.subr.mxu0 0.0
    %238 = vmatpush2.msra.mxu0 0.0
    %239 = vmatprep.subr.mxu0 0.0
    %240 = vmatpush2.msra.mxu0 0.0
    %241 = vmatprep.subr.mxu0 0.0
    %242 = vmatpush2.msra.mxu0 0.0
    %243 = vmatprep.subr.mxu0 0.0
    %244 = vmatpush2.msra.mxu0 0.0
    %245 = vmatprep.subr.mxu0 0.0
    %246 = vmatpush2.msra.mxu0 0.0
    %247 = vmatprep.subr.mxu0 0.0
    %248 = vmatpush2.msra.mxu0 0.0
    %249 = vmatprep.subr.mxu0 0.0
    %250 = vmatpush2.msra.mxu0 0.0
    %251 = vmatprep.subr.mxu0 0.0
    %252 = vmatpush2.msra.mxu0 0.0
    %253 = vmatprep.subr.mxu0 0.0
    %254 = vmatpush2.msra.mxu0 0.0
    %255 = vmatprep.subr.mxu0 0.0
    %256 = vmatpush2.msra.mxu0 0.0
    %257 = vmatprep.subr.mxu0 0.0
    %258 = vmatpush2.msra.mxu0 0.0
    %259 = vmatprep.subr.mxu0 0.0
    %260 = vmatpush2.msra.mxu0 0.0
    %261 = vmatprep.mubr.f32.mxu0 0.0
    %262 = vmatmul.mubr.f32.gmra.mxu0 %v195
    %v263 = vpop.f32.mrf.mxu0
    %v264 = vadd.f32 %v192, %v263
    %v265 = vpop.f32.mrf.mxu0
    %266 = vdwg.mxu0
    %v267 = vmax.f32 %v264, 0.0
    %v268 = vld [vmem:[%s2 + $0x70] sm:$0xff]
    %v269 = vld [vmem:[%s2 + $0x78] sm:$0xff]
    %v270 = vld [vmem:[%s2 + $0x80] sm:$0xff]
    %v271 = vld [vmem:[%s2 + $0x88] sm:$0xff]
    %v272 = vld [vmem:[%s2 + $0x90] sm:$0xff]
    %v273 = vld [vmem:[%s2 + $0x98] sm:$0xff]
    %v274 = vld [vmem:[%s2 + $0xa0] sm:$0xff]
    %v275 = vld [vmem:[%s2 + $0xa8] sm:$0xff]
    %v276 = vld [vmem:[%s2 + $0xb0] sm:$0x1]
    %v277 = vlaneseq
    %v278 = vshrl.u32 %v277, 7
    %v279 = vsub.s32 0, %v278
    %v280 = vrot.slane %v276, %v279
    %v282 = vsel %vm193, %v267, 0
    %284 = vmatprep.subr.mxu0 0.0
    %285 = vmatpush1.msra.mxu0 0.0
    %286 = vmatprep.subr.mxu0 0.0
    %287 = vmatpush1.msra.mxu0 0.0
    %288 = vmatprep.subr.mxu0 0.0
    %289 = vmatpush1.msra.mxu0 0.0
    %290 = vmatprep.subr.mxu0 0.0
    %291 = vmatpush1.msra.mxu0 0.0
    %292 = vmatprep.subr.mxu0 0.0
    %293 = vmatpush1.msra.mxu0 0.0
    %294 = vmatprep.subr.mxu0 0.0
    %295 = vmatpush1.msra.mxu0 0.0
    %296 = vmatprep.subr.mxu0 0.0
    %297 = vmatpush1.msra.mxu0 0.0
    %298 = vmatprep.subr.mxu0 0.0
    %299 = vmatpush1.msra.mxu0 0.0
    %300 = vmatprep.subr.mxu0 0.0
    %301 = vmatpush1.msra.mxu0 %v275
    %302 = vmatprep.subr.mxu0 0.0
    %303 = vmatpush1.msra.mxu0 %v274
    %304 = vmatprep.subr.mxu0 0.0
    %305 = vmatpush1.msra.mxu0 %v273
    %306 = vmatprep.subr.mxu0 0.0
    %307 = vmatpush1.msra.mxu0 %v272
    %308 = vmatprep.subr.mxu0 0.0
    %309 = vmatpush1.msra.mxu0 %v271
    %310 = vmatprep.subr.mxu0 0.0
    %311 = vmatpush1.msra.mxu0 %v270
    %312 = vmatprep.subr.mxu0 0.0
    %313 = vmatpush1.msra.mxu0 %v269
    %314 = vmatprep.subr.mxu0 0.0
    %315 = vmatpush1.msra.mxu0 %v268
    %316 = vmatprep.subr.mxu0 0.0
    %317 = vmatpush2.msra.mxu0 0.0
    %318 = vmatprep.subr.mxu0 0.0
    %319 = vmatpush2.msra.mxu0 0.0
    %320 = vmatprep.subr.mxu0 0.0
    %321 = vmatpush2.msra.mxu0 0.0
    %322 = vmatprep.subr.mxu0 0.0
    %323 = vmatpush2.msra.mxu0 0.0
    %324 = vmatprep.subr.mxu0 0.0
    %325 = vmatpush2.msra.mxu0 0.0
    %326 = vmatprep.subr.mxu0 0.0
    %327 = vmatpush2.msra.mxu0 0.0
    %328 = vmatprep.subr.mxu0 0.0
    %329 = vmatpush2.msra.mxu0 0.0
    %330 = vmatprep.subr.mxu0 0.0
    %331 = vmatpush2.msra.mxu0 0.0
    %332 = vmatprep.subr.mxu0 0.0
    %333 = vmatpush2.msra.mxu0 0.0
    %334 = vmatprep.subr.mxu0 0.0
    %335 = vmatpush2.msra.mxu0 0.0
    %336 = vmatprep.subr.mxu0 0.0
    %337 = vmatpush2.msra.mxu0 0.0
    %338 = vmatprep.subr.mxu0 0.0
    %339 = vmatpush2.msra.mxu0 0.0
    %340 = vmatprep.subr.mxu0 0.0
    %341 = vmatpush2.msra.mxu0 0.0
    %342 = vmatprep.subr.mxu0 0.0
    %343 = vmatpush2.msra.mxu0 0.0
    %344 = vmatprep.subr.mxu0 0.0
    %345 = vmatpush2.msra.mxu0 0.0
    %346 = vmatprep.subr.mxu0 0.0
    %347 = vmatpush2.msra.mxu0 0.0
    %348 = vmatprep.mubr.f32.mxu0 0.0
    %349 = vmatmul.mubr.f32.gmra.mxu0 %v282
    %v350 = vpop.f32.mrf.mxu0
    %v351 = vadd.f32 %v280, %v350
    %v352 = vpop.f32.mrf.mxu0
    %353 = vdwg.mxu0
    %v354 = vadd.f32 %v15, %v351
    %355 = vst.msk [vmem:[#allocation2] sm:$0xff] %vm100, %v354
    // Predicated region
    $region14: #{tpu_custom_call.1} parent=1 // pred_check
      _
    $region15: #{tpu_custom_call.1} parent=1 // pred_check_branch
      %357 = sbr.rel (0) target = $region17
    $region16: #{tpu_custom_call.1} parent=1 // pred_region
      %s359 = ssub.s32 128, 128
      %360 = vsyncadd [#allocation3], %s359
      %s362 = sshll.u32 [#allocation2], 4
      %s363 = int_to_ptr.vmem [resolvable:$true] %s362
      %365 = dma.vmem_to_hbm [thread:$0]  %s363, 128, %s3, [#allocation3]
    $region17: #{tpu_custom_call.1} parent=1 // pred_fallthru
      _
    // Predicated region
    $region18: #{tpu_custom_call.1} parent=1 // pred_check
      _
    $region19: #{tpu_custom_call.1} parent=1 // pred_check_branch
      %367 = sbr.rel (0) target = $region21
    $region20: #{tpu_custom_call.1} parent=1 // pred_region
      %368 = dma.done [#allocation3], 128
    $region21: #{tpu_custom_call.1} parent=1 // pred_fallthru
      _
    %369 = vsyncpa [#allocation3], 1

</llo_original>
